<compile_context>
chip_gen: v7x
topology: tpu7x:2x2x1
jax: 0.10.0
libtpu: 0.0.40
codegen_flags: <defaults>
</compile_context>

<pallas_src>
import math

import jax
import jax.numpy as jnp
from jax.experimental import pallas as pl
from jax.experimental.pallas import tpu as pltpu

# --- small synthetic config -------------------------------------------------
B, S, H = 2, 8, 32          # batch, seq_len, hidden_size
NUM_HEADS = 4
HEAD_DIM = H // NUM_HEADS   # 8
INTER = 64                  # intermediate_size
EPS = 1e-6                  # rms_norm_eps
NEG_MIN = float(jnp.finfo(jnp.float32).min)

HP = 128                    # hidden padded to one full lane tile
NHS = NUM_HEADS * S         # 32: blocked-attention columns per batch
VDW = H + NUM_HEADS         # 36: blocked-V width incl. per-head denominator cols
QKVW = 256                  # fused [q|q_rot|k|k_rot|v|ones|pad] projection width
W_ROWS = 2 * HP + H + INTER          # 352 rows in the bf16 weight slab
M_ROWS = ((NHS + NUM_HEADS + 7) // 8) * 8   # 40 rows in the mask slab
ATTW = 128                  # per-batch attention-constants slab width


def _rotate_half(x):
    half = x.shape[-1] // 2
    return jnp.concatenate([-x[..., half:], x[..., :half]], axis=-1)


# --- Pallas kernel (one batch row-block per grid step) -----------------------
def decoder_layer_kernel(x_ref, att_ref, m_ref, w_ref, c_ref, out_ref):
    f32, bf16 = jnp.float32, jnp.bfloat16
    x = x_ref[...]                                   # (S, HP) f32, lanes >= H are 0

    b_qkv = c_ref[0:1, :]                            # (1, QKVW)
    bo = c_ref[1:2, 0:HP]                            # (1, HP)   zero-padded
    ln1 = c_ref[2:3, 0:HP]
    ln2 = c_ref[3:4, 0:HP]

    def rmsnorm(h, w):
        # mean over the TRUE hidden size; padding lanes are exactly zero.
        var = jnp.sum(h * h, axis=-1, keepdims=True) * (1.0 / H)
        return w * (h * jax.lax.rsqrt(var + EPS))

    # ---- fused q / q_rot / k / k_rot / v(+ones) projection ----------------
    hn = rmsnorm(x, ln1)
    qkv = jnp.dot(hn.astype(bf16), w_ref[0:HP, :],
                  preferred_element_type=f32) + b_qkv             # (S, QKVW)

    big = att_ref[:, 0:NHS]                                       # (S, NHS) additive mask
    cosb = att_ref[:, NHS:NHS + H]                                # (S, H)
    sinb = att_ref[:, NHS + H:NHS + 2 * H]                        # (S, H)

    q, qr = qkv[:, 0:H], qkv[:, H:2 * H]
    k, kr = qkv[:, 2 * H:3 * H], qkv[:, 3 * H:4 * H]
    vx = qkv[:, 4 * H:4 * H + VDW]                                # (S, VDW): [v | 1s]

    # RoPE: rotate_half folded into the *_rot weights, 1/sqrt(head_dim) into wq.
    qe = q * cosb + qr * sinb                                     # (S, H) f32
    ke = k * cosb + kr * sinb

    # ---- all-heads attention via head-block-masked K / V -------------------
    vdmask = m_ref[0:NHS, 0:VDW]                                  # (NHS, VDW)
    kmask = vdmask[:, 0:H]                                        # (NHS, H)
    selh = m_ref[NHS:NHS + NUM_HEADS, 0:H]                        # (NH, H)

    kblk = jnp.concatenate([ke] * NUM_HEADS, axis=0) * kmask      # (NHS, H)
    vblk = jnp.concatenate([vx] * NUM_HEADS, axis=0) * vdmask     # (NHS, VDW)

    # scores for every head in one MXU pass; rhs contraction on dim 1 (trans_b).
    s = jax.lax.dot_general(qe.astype(bf16), kblk.astype(bf16),
                            (((1,), (1,)), ((), ())),
                            preferred_element_type=f32) + big     # (S, NHS)
    # Row-wide shift is per-head-equivalent (cancels); masked cols -> exactly 0.
    e = jnp.exp(s - jnp.max(s, axis=-1, keepdims=True))           # (S, NHS) f32

    # one PV pass also produces the per-head softmax denominators (cols H:VDW).
    pv = jnp.dot(e.astype(bf16), vblk.astype(bf16),
                 preferred_element_type=f32)                      # (S, VDW)
    ctx, denom = pv[:, 0:H], pv[:, H:VDW]                         # (S,H), (S,NH)
    dinv = pl.reciprocal(denom, approx=True)                      # EUP slot
    ctx = ctx * jnp.dot(dinv, selh, preferred_element_type=f32)   # per-head norm

    attn = jnp.dot(ctx.astype(bf16), w_ref[HP:HP + H, 0:HP],
                   preferred_element_type=f32) + bo               # (S, HP)
    h1 = x + attn                                                 # first residual

    # ---- MLP (fused gate|up, SiLU) ------------------------------------------
    h2 = rmsnorm(h1, ln2)
    gu = jnp.dot(h2.astype(bf16), w_ref[HP + H:2 * HP + H, 0:2 * INTER],
                 preferred_element_type=f32)                      # (S, 2*INTER)
    gate, up = gu[:, 0:INTER], gu[:, INTER:2 * INTER]
    act = gate * jax.nn.sigmoid(gate)                             # SiLU in f32
    mlp = jnp.dot((act * up).astype(bf16),
                  w_ref[2 * HP + H:2 * HP + H + INTER, 0:HP],
                  preferred_element_type=f32)                     # (S, HP)

    out_ref[...] = h1 + mlp                                       # second residual


# --- wrapper ------------------------------------------------------------------
@jax.jit
def internlm_decoder_layer(x, mask, cos, sin, p):
    """Forward of InternLMDecoderLayer.

    x: (B, S, H) f32; mask: (B, 1, S, S) additive f32;
    cos/sin: (S, HEAD_DIM) rotary tables for position_ids = arange(S);
    p: dict of f32 weights stored as (in_features, out_features).
    All weight folding / slab packing below would happen once at load time.
    """
    f32, bf16 = jnp.float32, jnp.bfloat16

    # -- rotate_half as a signed per-head output-feature permutation; fold it
    #    (and 1/sqrt(head_dim)) into the q/k projection weights.
    half = HEAD_DIM // 2
    p_head = jnp.zeros((HEAD_DIM, HEAD_DIM), f32)
    p_head = p_head.at[jnp.arange(half) + half, jnp.arange(half)].set(-1.0)
    p_head = p_head.at[jnp.arange(half), jnp.arange(half) + half].set(1.0)
    rot_p = jnp.kron(jnp.eye(NUM_HEADS, dtype=f32), p_head)          # (H, H)

    scale = 1.0 / math.sqrt(HEAD_DIM)
    wq_s, bq_s = p['wq'] * scale, p['bq'] * scale
    wq_r, bq_r = wq_s @ rot_p, bq_s @ rot_p
    wk_r, bk_r = p['wk'] @ rot_p, p['bk'] @ rot_p

    # -- fused QKV weight: columns [q | q_rot | k | k_rot | v | ones(NH) | pad].
    #    Input rows padded to HP=128 (padding rows multiply zero lanes of hn).
    w_qkv = jnp.zeros((HP, QKVW), f32)
    w_qkv = w_qkv.at[:H, 0:H].set(wq_s)
    w_qkv = w_qkv.at[:H, H:2 * H].set(wq_r)
    w_qkv = w_qkv.at[:H, 2 * H:3 * H].set(p['wk'])
    w_qkv = w_qkv.at[:H, 3 * H:4 * H].set(wk_r)
    w_qkv = w_qkv.at[:H, 4 * H:5 * H].set(p['wv'])
    b_qkv = jnp.zeros((QKVW,), f32)
    b_qkv = b_qkv.at[0:H].set(bq_s[0])
    b_qkv = b_qkv.at[H:2 * H].set(bq_r[0])
    b_qkv = b_qkv.at[2 * H:3 * H].set(p['bk'][0])
    b_qkv = b_qkv.at[3 * H:4 * H].set(bk_r[0])
    b_qkv = b_qkv.at[4 * H:5 * H].set(p['bv'][0])
    b_qkv = b_qkv.at[5 * H:5 * H + NUM_HEADS].set(1.0)   # denominator "ones" cols

    # -- single bf16 weight slab: rows [W_qkv | Wo | Wg|Wu | Wd].
    w_slab = jnp.zeros((W_ROWS, QKVW), f32)
    w_slab = w_slab.at[0:HP, :].set(w_qkv)
    w_slab = w_slab.at[HP:HP + H, 0:H].set(p['wo'])
    w_slab = w_slab.at[HP + H:HP + 2 * H, 0:INTER].set(p['wg'])
    w_slab = w_slab.at[HP + H:HP + 2 * H, INTER:2 * INTER].set(p['wu'])
    w_slab = w_slab.at[2 * HP + H:2 * HP + H + INTER, 0:H].set(p['wd'])
    w_slab = w_slab.astype(bf16)

    # -- single f32 bias / layernorm slab (padding lanes stay zero).
    c_slab = jnp.zeros((8, QKVW), f32)
    c_slab = c_slab.at[0, :].set(b_qkv)
    c_slab = c_slab.at[1, 0:H].set(p['bo'][0])
    c_slab = c_slab.at[2, 0:H].set(p['ln1'][0])
    c_slab = c_slab.at[3, 0:H].set(p['ln2'][0])

    # -- per-batch attention constants slab: [bigmask | cos | sin | pad].
    cos_t = jnp.tile(cos, (1, NUM_HEADS)).astype(f32)                 # (S, H)
    sin_t = jnp.tile(sin, (1, NUM_HEADS)).astype(f32)
    big = jnp.tile(mask[:, 0].astype(f32), (1, 1, NUM_HEADS)).reshape(B * S, NHS)
    att_slab = jnp.concatenate(
        [big, jnp.tile(cos_t, (B, 1)), jnp.tile(sin_t, (B, 1)),
         jnp.zeros((B * S, ATTW - NHS - 2 * H), f32)], axis=1)        # (B*S, 128)

    # -- head-block masks: vdmask = [feature-head mask | head indicator];
    #    selh broadcasts each head's 1/denominator to that head's columns.
    row_head = jnp.arange(NHS) // S
    feat_head = jnp.arange(H) // HEAD_DIM
    kmask = (feat_head[None, :] == row_head[:, None]).astype(f32)             # (NHS, H)
    ind = (jnp.arange(NUM_HEADS)[None, :] == row_head[:, None]).astype(f32)   # (NHS, NH)
    selh = (feat_head[None, :] == jnp.arange(NUM_HEADS)[:, None]).astype(f32) # (NH, H)
    m_slab = jnp.zeros((M_ROWS, 128), f32)
    m_slab = m_slab.at[0:NHS, 0:H].set(kmask)
    m_slab = m_slab.at[0:NHS, H:VDW].set(ind)
    m_slab = m_slab.at[NHS:NHS + NUM_HEADS, 0:H].set(selh)

    # -- lane-padded residual-stream input (aliased to the output).
    x_p = jnp.zeros((B * S, HP), f32).at[:, 0:H].set(x.reshape(B * S, H).astype(f32))

    operands = (x_p, att_slab, m_slab, w_slab, c_slab)

    T = B * S
    flops = (2 * T * HP * QKVW            # fused qkv projection
             + 2 * T * NHS * H            # scores
             + 2 * T * NHS * VDW          # PV + denominators
             + 2 * T * NUM_HEADS * H      # per-head normalisation broadcast
             + 2 * T * H * HP             # o_proj
             + 2 * T * HP * 2 * INTER     # gate|up
             + 2 * T * INTER * HP)        # down_proj
    transcendentals = T * NHS + T * INTER + T * NUM_HEADS + 2 * T
    bytes_accessed = (sum(int(a.size) * a.dtype.itemsize for a in operands)
                      + T * HP * 4)

    out = pl.pallas_call(
        decoder_layer_kernel,
        out_shape=jax.ShapeDtypeStruct((B * S, HP), f32),
        grid=(B,),
        in_specs=[
            pl.BlockSpec((S, HP), lambda b: (b, 0)),          # x (per batch)
            pl.BlockSpec((S, ATTW), lambda b: (b, 0)),        # mask/cos/sin (per batch)
            pl.BlockSpec(m_slab.shape, lambda b: (0, 0)),     # head-block masks
            pl.BlockSpec(w_slab.shape, lambda b: (0, 0)),     # bf16 weight slab
            pl.BlockSpec(c_slab.shape, lambda b: (0, 0)),     # f32 bias/ln slab
        ],
        out_specs=pl.BlockSpec((S, HP), lambda b: (b, 0)),
        input_output_aliases={0: 0},                          # x_p buffer reused
        compiler_params=pltpu.CompilerParams(dimension_semantics=("parallel",)),
        cost_estimate=pl.CostEstimate(
            flops=int(flops),
            transcendentals=int(transcendentals),
            bytes_accessed=int(bytes_accessed)),
    )(*operands)
    return out[:, 0:H].reshape(B, S, H)


# --- pure-JAX reference (matches the PyTorch module, f32) ---------------------
def reference(x, mask, cos, sin, p):
    def rmsnorm(h, w):
        var = jnp.mean(h * h, axis=-1, keepdims=True)
        return w * (h * jax.lax.rsqrt(var + EPS))

    h = rmsnorm(x, p['ln1'])
    q = h @ p['wq'] + p['bq']
    k = h @ p['wk'] + p['bk']
    v = h @ p['wv'] + p['bv']

    def split(t):
        return t.reshape(B, S, NUM_HEADS, HEAD_DIM).transpose(0, 2, 1, 3)

    q, k, v = split(q), split(k), split(v)
    cos_b, sin_b = cos[None, None], sin[None, None]
    q = q * cos_b + _rotate_half(q) * sin_b
    k = k * cos_b + _rotate_half(k) * sin_b
    s = jnp.einsum('bhqd,bhkd->bhqk', q, k) / math.sqrt(HEAD_DIM)
    s = jnp.maximum(s + mask, NEG_MIN)
    s = s - jnp.max(s, axis=-1, keepdims=True)
    e = jnp.exp(s)
    pw = e / jnp.sum(e, axis=-1, keepdims=True)
    o = jnp.einsum('bhqk,bhkd->bhqd', pw, v)
    o = o.transpose(0, 2, 1, 3).reshape(B, S, H)
    o = o @ p['wo'] + p['bo']
    h1 = x + o
    h2 = rmsnorm(h1, p['ln2'])
    mlp = (jax.nn.silu(h2 @ p['wg']) * (h2 @ p['wu'])) @ p['wd']
    return h1 + mlp


if __name__ == "__main__":
    key = jax.random.PRNGKey(0)
    keys = jax.random.split(key, 16)

    def init(k, shape, scale=0.02):
        return (scale * jax.random.normal(k, shape)).astype(jnp.float32)

    params = {
        'wq': init(keys[0], (H, H)), 'bq': init(keys[1], (1, H)),
        'wk': init(keys[2], (H, H)), 'bk': init(keys[3], (1, H)),
        'wv': init(keys[4], (H, H)), 'bv': init(keys[5], (1, H)),
        'wo': init(keys[6], (H, H)), 'bo': init(keys[7], (1, H)),
        'wg': init(keys[8], (H, INTER)),
        'wu': init(keys[9], (H, INTER)),
        'wd': init(keys[10], (INTER, H)),
        'ln1': jnp.ones((1, H), jnp.float32),
        'ln2': jnp.ones((1, H), jnp.float32),
    }

    x = jax.random.normal(keys[11], (B, S, H), jnp.float32)

    # causal additive attention mask (B, 1, S, S)
    causal = jnp.tril(jnp.ones((S, S), dtype=bool))
    mask2d = jnp.where(causal, 0.0, -1e9).astype(jnp.float32)
    mask = jnp.broadcast_to(mask2d[None, None], (B, 1, S, S))

    # rotary tables for position_ids = arange(S)
    inv_freq = 1.0 / (10000.0 ** (jnp.arange(0, HEAD_DIM, 2, dtype=jnp.float32) / HEAD_DIM))
    t = jnp.arange(S, dtype=jnp.float32)
    freqs = jnp.einsum('i,j->ij', t, inv_freq)
    emb = jnp.concatenate([freqs, freqs], axis=-1)   # (S, HEAD_DIM)
    cos, sin = jnp.cos(emb), jnp.sin(emb)

    out = internlm_decoder_layer(x, mask, cos, sin, params)
    out = jax.block_until_ready(out)

    ref = reference(x, mask, cos, sin, params)
    assert out.shape == (B, S, H)
    max_err = float(jnp.max(jnp.abs(out - ref)))
    # bf16 matmul operands + approx reciprocal -> compare at ~5e-3.
    if not bool(jnp.allclose(out, ref, atol=5e-3, rtol=5e-3)):
        raise AssertionError(f"kernel/reference mismatch, max abs err = {max_err}")
    print("KERNEL_OK")
</pallas_src>

<mosaic_0001>
module attributes {stable_mosaic.version = 11 : i64} {
  func.func @decoder_layer_kernel(%arg0: i32, %arg1: memref<8x128xf32, #tpu.memory_space<vmem>>, %arg2: memref<8x128xf32, #tpu.memory_space<vmem>>, %arg3: memref<40x128xf32, #tpu.memory_space<vmem>>, %arg4: memref<352x256xbf16, #tpu.memory_space<vmem>>, %arg5: memref<8x256xf32, #tpu.memory_space<vmem>>, %arg6: memref<8x128xf32, #tpu.memory_space<vmem>>) attributes {dimension_semantics = [#tpu.dimension_semantics<parallel>], iteration_bounds = array<i64: 2>, scalar_prefetch = 0 : i64, scratch_operands = 0 : i64, tpu.core_type = #tpu.core_type<tc>, window_params = [{transform_indices = @transform_0, window_bounds = array<i64: 8, 128>}, {transform_indices = @transform_1, window_bounds = array<i64: 8, 128>}, {pipeline_mode = #tpu.pipeline_mode<synchronous>, transform_indices = @transform_2, window_bounds = array<i64: 40, 128>}, {pipeline_mode = #tpu.pipeline_mode<synchronous>, transform_indices = @transform_3, window_bounds = array<i64: 352, 256>}, {pipeline_mode = #tpu.pipeline_mode<synchronous>, transform_indices = @transform_4, window_bounds = array<i64: 8, 256>}, {transform_indices = @transform_5, window_bounds = array<i64: 8, 128>}]} {
    %c0 = arith.constant 0 : index
    %c0_0 = arith.constant 0 : index
    %0 = vector.load %arg1[%c0, %c0_0] : memref<8x128xf32, #tpu.memory_space<vmem>>, vector<8x128xf32>
    %c0_1 = arith.constant 0 : index
    %c0_2 = arith.constant 0 : index
    %1 = vector.load %arg5[%c0_1, %c0_2] : memref<8x256xf32, #tpu.memory_space<vmem>>, vector<1x256xf32>
    %c1 = arith.constant 1 : index
    %c0_3 = arith.constant 0 : index
    %2 = vector.load %arg5[%c1, %c0_3] : memref<8x256xf32, #tpu.memory_space<vmem>>, vector<1x128xf32>
    %c2 = arith.constant 2 : index
    %c0_4 = arith.constant 0 : index
    %3 = vector.load %arg5[%c2, %c0_4] : memref<8x256xf32, #tpu.memory_space<vmem>>, vector<1x128xf32>
    %c3 = arith.constant 3 : index
    %c0_5 = arith.constant 0 : index
    %4 = vector.load %arg5[%c3, %c0_5] : memref<8x256xf32, #tpu.memory_space<vmem>>, vector<1x128xf32>
    %5 = arith.mulf %0, %0 : vector<8x128xf32>
    %cst = arith.constant dense<0.000000e+00> : vector<8xf32>
    %6 = vector.multi_reduction <add>, %5, %cst [1] : vector<8x128xf32> to vector<8xf32>
    %7 = vector.shape_cast %6 : vector<8xf32> to vector<8x1xf32>
    %cst_6 = arith.constant 3.125000e-02 : f32
    %8 = vector.broadcast %cst_6 : f32 to vector<8x1xf32>
    %9 = arith.mulf %7, %8 : vector<8x1xf32>
    %cst_7 = arith.constant 9.99999997E-7 : f32
    %10 = vector.broadcast %cst_7 : f32 to vector<8x1xf32>
    %11 = arith.addf %9, %10 : vector<8x1xf32>
    %12 = math.rsqrt %11 : vector<8x1xf32>
    %13 = vector.broadcast %12 : vector<8x1xf32> to vector<8x128xf32>
    %14 = arith.mulf %0, %13 : vector<8x128xf32>
    %15 = vector.broadcast %3 : vector<1x128xf32> to vector<8x128xf32>
    %16 = arith.mulf %15, %14 : vector<8x128xf32>
    %17 = arith.truncf %16 : vector<8x128xf32> to vector<8x128xbf16>
    %c0_8 = arith.constant 0 : index
    %c0_9 = arith.constant 0 : index
    %18 = vector.load %arg4[%c0_8, %c0_9] : memref<352x256xbf16, #tpu.memory_space<vmem>>, vector<128x256xbf16>
    %cst_10 = arith.constant dense<0.000000e+00> : vector<8x256xf32>
    %19 = tpu.matmul %17, %18, %cst_10 {dimension_numbers = #tpu.dot_dimension_numbers<[1], [0], [0], [1], [0, 0, 1, 1], [], []>} : vector<8x128xbf16>, vector<128x256xbf16>, vector<8x256xf32> -> vector<8x256xf32>
    %20 = vector.broadcast %1 : vector<1x256xf32> to vector<8x256xf32>
    %21 = arith.addf %19, %20 : vector<8x256xf32>
    %c0_11 = arith.constant 0 : index
    %c0_12 = arith.constant 0 : index
    %22 = vector.load %arg2[%c0_11, %c0_12] : memref<8x128xf32, #tpu.memory_space<vmem>>, vector<8x32xf32>
    %c0_13 = arith.constant 0 : index
    %c32 = arith.constant 32 : index
    %23 = vector.load %arg2[%c0_13, %c32] : memref<8x128xf32, #tpu.memory_space<vmem>>, vector<8x32xf32>
    %c0_14 = arith.constant 0 : index
    %c64 = arith.constant 64 : index
    %24 = vector.load %arg2[%c0_14, %c64] : memref<8x128xf32, #tpu.memory_space<vmem>>, vector<8x32xf32>
    %25 = vector.extract_strided_slice %21 {offsets = [0, 0], sizes = [8, 32], strides = [1, 1]} : vector<8x256xf32> to vector<8x32xf32>
    %26 = vector.extract_strided_slice %21 {offsets = [0, 32], sizes = [8, 32], strides = [1, 1]} : vector<8x256xf32> to vector<8x32xf32>
    %27 = vector.extract_strided_slice %21 {offsets = [0, 64], sizes = [8, 32], strides = [1, 1]} : vector<8x256xf32> to vector<8x32xf32>
    %28 = vector.extract_strided_slice %21 {offsets = [0, 96], sizes = [8, 32], strides = [1, 1]} : vector<8x256xf32> to vector<8x32xf32>
    %29 = vector.extract_strided_slice %21 {offsets = [0, 128], sizes = [8, 36], strides = [1, 1]} : vector<8x256xf32> to vector<8x36xf32>
    %30 = arith.mulf %25, %23 : vector<8x32xf32>
    %31 = arith.mulf %26, %24 : vector<8x32xf32>
    %32 = arith.addf %30, %31 : vector<8x32xf32>
    %33 = arith.mulf %27, %23 : vector<8x32xf32>
    %34 = arith.mulf %28, %24 : vector<8x32xf32>
    %35 = arith.addf %33, %34 : vector<8x32xf32>
    %c0_15 = arith.constant 0 : index
    %c0_16 = arith.constant 0 : index
    %36 = vector.load %arg3[%c0_15, %c0_16] : memref<40x128xf32, #tpu.memory_space<vmem>>, vector<32x36xf32>
    %37 = vector.extract_strided_slice %36 {offsets = [0, 0], sizes = [32, 32], strides = [1, 1]} : vector<32x36xf32> to vector<32x32xf32>
    %c32_17 = arith.constant 32 : index
    %c0_18 = arith.constant 0 : index
    %38 = vector.load %arg3[%c32_17, %c0_18] : memref<40x128xf32, #tpu.memory_space<vmem>>, vector<4x32xf32>
    %39 = tpu.concatenate %35, %35, %35, %35 in 0 : vector<8x32xf32>, vector<8x32xf32>, vector<8x32xf32>, vector<8x32xf32> -> vector<32x32xf32>
    %40 = arith.mulf %39, %37 : vector<32x32xf32>
    %41 = tpu.concatenate %29, %29, %29, %29 in 0 : vector<8x36xf32>, vector<8x36xf32>, vector<8x36xf32>, vector<8x36xf32> -> vector<32x36xf32>
    %42 = arith.mulf %41, %36 : vector<32x36xf32>
    %43 = arith.truncf %32 : vector<8x32xf32> to vector<8x32xbf16>
    %44 = arith.truncf %40 : vector<32x32xf32> to vector<32x32xbf16>
    %cst_19 = arith.constant dense<0.000000e+00> : vector<8x32xf32>
    %45 = tpu.matmul %43, %44, %cst_19 {dimension_numbers = #tpu.dot_dimension_numbers<[1], [1], [0], [0], [0, 0, 1, 0], [], []>} : vector<8x32xbf16>, vector<32x32xbf16>, vector<8x32xf32> -> vector<8x32xf32>
    %46 = arith.addf %45, %22 : vector<8x32xf32>
    %cst_20 = arith.constant dense<0xFF800000> : vector<8xf32>
    %47 = vector.multi_reduction <maximumf>, %46, %cst_20 [1] : vector<8x32xf32> to vector<8xf32>
    %48 = vector.shape_cast %47 : vector<8xf32> to vector<8x1xf32>
    %49 = vector.broadcast %48 : vector<8x1xf32> to vector<8x32xf32>
    %50 = arith.subf %46, %49 : vector<8x32xf32>
    %51 = math.exp %50 : vector<8x32xf32>
    %52 = arith.truncf %51 : vector<8x32xf32> to vector<8x32xbf16>
    %53 = arith.truncf %42 : vector<32x36xf32> to vector<32x36xbf16>
    %cst_21 = arith.constant dense<0.000000e+00> : vector<8x36xf32>
    %54 = tpu.matmul %52, %53, %cst_21 {dimension_numbers = #tpu.dot_dimension_numbers<[1], [0], [0], [1], [0, 0, 1, 1], [], []>} : vector<8x32xbf16>, vector<32x36xbf16>, vector<8x36xf32> -> vector<8x36xf32>
    %55 = vector.extract_strided_slice %54 {offsets = [0, 0], sizes = [8, 32], strides = [1, 1]} : vector<8x36xf32> to vector<8x32xf32>
    %56 = vector.extract_strided_slice %54 {offsets = [0, 32], sizes = [8, 4], strides = [1, 1]} : vector<8x36xf32> to vector<8x4xf32>
    %57 = tpu.reciprocal %56 {approx = true} : vector<8x4xf32> -> vector<8x4xf32>
    %cst_22 = arith.constant dense<0.000000e+00> : vector<8x32xf32>
    %58 = tpu.matmul %57, %38, %cst_22 {dimension_numbers = #tpu.dot_dimension_numbers<[1], [0], [0], [1], [0, 0, 1, 1], [], []>} : vector<8x4xf32>, vector<4x32xf32>, vector<8x32xf32> -> vector<8x32xf32>
    %59 = arith.mulf %55, %58 : vector<8x32xf32>
    %60 = arith.truncf %59 : vector<8x32xf32> to vector<8x32xbf16>
    %c128 = arith.constant 128 : index
    %c0_23 = arith.constant 0 : index
    %61 = vector.load %arg4[%c128, %c0_23] : memref<352x256xbf16, #tpu.memory_space<vmem>>, vector<32x128xbf16>
    %cst_24 = arith.constant dense<0.000000e+00> : vector<8x128xf32>
    %62 = tpu.matmul %60, %61, %cst_24 {dimension_numbers = #tpu.dot_dimension_numbers<[1], [0], [0], [1], [0, 0, 1, 1], [], []>} : vector<8x32xbf16>, vector<32x128xbf16>, vector<8x128xf32> -> vector<8x128xf32>
    %63 = vector.broadcast %2 : vector<1x128xf32> to vector<8x128xf32>
    %64 = arith.addf %62, %63 : vector<8x128xf32>
    %65 = arith.addf %0, %64 : vector<8x128xf32>
    %66 = arith.mulf %65, %65 : vector<8x128xf32>
    %cst_25 = arith.constant dense<0.000000e+00> : vector<8xf32>
    %67 = vector.multi_reduction <add>, %66, %cst_25 [1] : vector<8x128xf32> to vector<8xf32>
    %68 = vector.shape_cast %67 : vector<8xf32> to vector<8x1xf32>
    %cst_26 = arith.constant 3.125000e-02 : f32
    %69 = vector.broadcast %cst_26 : f32 to vector<8x1xf32>
    %70 = arith.mulf %68, %69 : vector<8x1xf32>
    %cst_27 = arith.constant 9.99999997E-7 : f32
    %71 = vector.broadcast %cst_27 : f32 to vector<8x1xf32>
    %72 = arith.addf %70, %71 : vector<8x1xf32>
    %73 = math.rsqrt %72 : vector<8x1xf32>
    %74 = vector.broadcast %73 : vector<8x1xf32> to vector<8x128xf32>
    %75 = arith.mulf %65, %74 : vector<8x128xf32>
    %76 = vector.broadcast %4 : vector<1x128xf32> to vector<8x128xf32>
    %77 = arith.mulf %76, %75 : vector<8x128xf32>
    %78 = arith.truncf %77 : vector<8x128xf32> to vector<8x128xbf16>
    %c160 = arith.constant 160 : index
    %c0_28 = arith.constant 0 : index
    %79 = vector.load %arg4[%c160, %c0_28] : memref<352x256xbf16, #tpu.memory_space<vmem>>, vector<128x128xbf16>
    %cst_29 = arith.constant dense<0.000000e+00> : vector<8x128xf32>
    %80 = tpu.matmul %78, %79, %cst_29 {dimension_numbers = #tpu.dot_dimension_numbers<[1], [0], [0], [1], [0, 0, 1, 1], [], []>} : vector<8x128xbf16>, vector<128x128xbf16>, vector<8x128xf32> -> vector<8x128xf32>
    %81 = vector.extract_strided_slice %80 {offsets = [0, 0], sizes = [8, 64], strides = [1, 1]} : vector<8x128xf32> to vector<8x64xf32>
    %82 = vector.extract_strided_slice %80 {offsets = [0, 64], sizes = [8, 64], strides = [1, 1]} : vector<8x128xf32> to vector<8x64xf32>
    %83 = arith.negf %81 : vector<8x64xf32>
    %84 = math.exp %83 : vector<8x64xf32>
    %cst_30 = arith.constant 1.000000e+00 : f32
    %85 = vector.broadcast %cst_30 : f32 to vector<8x64xf32>
    %86 = arith.addf %85, %84 : vector<8x64xf32>
    %87 = arith.divf %85, %86 : vector<8x64xf32>
    %88 = arith.mulf %81, %87 : vector<8x64xf32>
    %89 = arith.mulf %88, %82 : vector<8x64xf32>
    %90 = arith.truncf %89 : vector<8x64xf32> to vector<8x64xbf16>
    %c288 = arith.constant 288 : index
    %c0_31 = arith.constant 0 : index
    %91 = vector.load %arg4[%c288, %c0_31] : memref<352x256xbf16, #tpu.memory_space<vmem>>, vector<64x128xbf16>
    %cst_32 = arith.constant dense<0.000000e+00> : vector<8x128xf32>
    %92 = tpu.matmul %90, %91, %cst_32 {dimension_numbers = #tpu.dot_dimension_numbers<[1], [0], [0], [1], [0, 0, 1, 1], [], []>} : vector<8x64xbf16>, vector<64x128xbf16>, vector<8x128xf32> -> vector<8x128xf32>
    %93 = arith.addf %65, %92 : vector<8x128xf32>
    %c0_33 = arith.constant 0 : index
    %c0_34 = arith.constant 0 : index
    %94 = vector.load %arg6[%c0_33, %c0_34] : memref<8x128xf32, #tpu.memory_space<vmem>>, vector<8x128xf32>
    tpu.vector_store %arg6[%c0_33, %c0_34], %93 {strides = array<i32>} : memref<8x128xf32, #tpu.memory_space<vmem>>, vector<8x128xf32>,
    return
  }
  func.func @transform_0(%arg0: i32) -> (i32, i32) {
    %c0_i32 = arith.constant 0 : i32
    %c0_i32_0 = arith.constant 0 : i32
    return %arg0, %c0_i32 : i32, i32
  }
  func.func @transform_1(%arg0: i32) -> (i32, i32) {
    %c0_i32 = arith.constant 0 : i32
    %c0_i32_0 = arith.constant 0 : i32
    return %arg0, %c0_i32 : i32, i32
  }
  func.func @transform_2(%arg0: i32) -> (i32, i32) {
    %c0_i32 = arith.constant 0 : i32
    %c0_i32_0 = arith.constant 0 : i32
    %c0_i32_1 = arith.constant 0 : i32
    return %c0_i32, %c0_i32_0 : i32, i32
  }
  func.func @transform_3(%arg0: i32) -> (i32, i32) {
    %c0_i32 = arith.constant 0 : i32
    %c0_i32_0 = arith.constant 0 : i32
    %c0_i32_1 = arith.constant 0 : i32
    return %c0_i32, %c0_i32_0 : i32, i32
  }
  func.func @transform_4(%arg0: i32) -> (i32, i32) {
    %c0_i32 = arith.constant 0 : i32
    %c0_i32_0 = arith.constant 0 : i32
    %c0_i32_1 = arith.constant 0 : i32
    return %c0_i32, %c0_i32_0 : i32, i32
  }
  func.func @transform_5(%arg0: i32) -> (i32, i32) {
    %c0_i32 = arith.constant 0 : i32
    %c0_i32_0 = arith.constant 0 : i32
    return %arg0, %c0_i32 : i32, i32
  }
}

</mosaic_0001>

<llo_original>
// kernel: tile.33
$region0: #{tile.33}
  %s0 = inlined_call_operand.vmem [shape: f32[2,1,8,4,8], index: 0, kind: input, shape index: {}]
  %s1 = inlined_call_operand.vmem [shape: f32[16,32], index: 1, kind: output, shape index: {}]
  $region1: #{tile.33} parent=0
    #allocation0 [shape = 'u8[65536]{0}', space=vmem, size = 0x10000, scoped, tag = 'scoped mem for input reshape']
    %s3 = sshllo.u32 0, 4
    %s4 = smul.addr 4, 15
    %s5 = scalar_lea.vmem %s0, %s4
    %v6 = vld [vmem:[%s5] sm:%s3]
    %s7 = scalar_lea.vmem [#allocation0], 120
    %8 = vst [vmem:[%s7] sm:%s3] %v6
    %s9 = smul.addr 4, 14
    %s10 = scalar_lea.vmem %s0, %s9
    %v11 = vld [vmem:[%s10] sm:%s3]
    %s12 = scalar_lea.vmem [#allocation0], 112
    %13 = vst [vmem:[%s12] sm:%s3] %v11
    %s14 = smul.addr 4, 13
    %s15 = scalar_lea.vmem %s0, %s14
    %v16 = vld [vmem:[%s15] sm:%s3]
    %s17 = scalar_lea.vmem [#allocation0], 104
    %18 = vst [vmem:[%s17] sm:%s3] %v16
    %s19 = smul.addr 4, 12
    %s20 = scalar_lea.vmem %s0, %s19
    %v21 = vld [vmem:[%s20] sm:%s3]
    %s22 = scalar_lea.vmem [#allocation0], 96
    %23 = vst [vmem:[%s22] sm:%s3] %v21
    %s24 = smul.addr 4, 11
    %s25 = scalar_lea.vmem %s0, %s24
    %v26 = vld [vmem:[%s25] sm:%s3]
    %s27 = scalar_lea.vmem [#allocation0], 88
    %28 = vst [vmem:[%s27] sm:%s3] %v26
    %s29 = smul.addr 4, 10
    %s30 = scalar_lea.vmem %s0, %s29
    %v31 = vld [vmem:[%s30] sm:%s3]
    %s32 = scalar_lea.vmem [#allocation0], 80
    %33 = vst [vmem:[%s32] sm:%s3] %v31
    %s34 = smul.addr 4, 9
    %s35 = scalar_lea.vmem %s0, %s34
    %v36 = vld [vmem:[%s35] sm:%s3]
    %s37 = scalar_lea.vmem [#allocation0], 72
    %38 = vst [vmem:[%s37] sm:%s3] %v36
    %s39 = smul.addr 4, 8
    %s40 = scalar_lea.vmem %s0, %s39
    %v41 = vld [vmem:[%s40] sm:%s3]
    %s42 = scalar_lea.vmem [#allocation0], 64
    %43 = vst [vmem:[%s42] sm:%s3] %v41
    %s44 = smul.addr 4, 7
    %s45 = scalar_lea.vmem %s0, %s44
    %v46 = vld [vmem:[%s45] sm:%s3]
    %s47 = scalar_lea.vmem [#allocation0], 56
    %48 = vst [vmem:[%s47] sm:%s3] %v46
    %s49 = smul.addr 4, 6
    %s50 = scalar_lea.vmem %s0, %s49
    %v51 = vld [vmem:[%s50] sm:%s3]
    %s52 = scalar_lea.vmem [#allocation0], 48
    %53 = vst [vmem:[%s52] sm:%s3] %v51
    %s54 = smul.addr 4, 5
    %s55 = scalar_lea.vmem %s0, %s54
    %v56 = vld [vmem:[%s55] sm:%s3]
    %s57 = scalar_lea.vmem [#allocation0], 40
    %58 = vst [vmem:[%s57] sm:%s3] %v56
    %s59 = smul.addr 4, 4
    %s60 = scalar_lea.vmem %s0, %s59
    %v61 = vld [vmem:[%s60] sm:%s3]
    %s62 = scalar_lea.vmem [#allocation0], 32
    %63 = vst [vmem:[%s62] sm:%s3] %v61
    %s64 = smul.addr 4, 3
    %s65 = scalar_lea.vmem %s0, %s64
    %v66 = vld [vmem:[%s65] sm:%s3]
    %s67 = scalar_lea.vmem [#allocation0], 24
    %68 = vst [vmem:[%s67] sm:%s3] %v66
    %s69 = smul.addr 4, 2
    %s70 = scalar_lea.vmem %s0, %s69
    %v71 = vld [vmem:[%s70] sm:%s3]
    %s72 = scalar_lea.vmem [#allocation0], 16
    %73 = vst [vmem:[%s72] sm:%s3] %v71
    %s74 = scalar_lea.vmem %s0, 4
    %v75 = vld [vmem:[%s74] sm:%s3]
    %s76 = scalar_lea.vmem [#allocation0], 8
    %77 = vst [vmem:[%s76] sm:%s3] %v75
    %v78 = vld [vmem:[%s0] sm:%s3]
    %79 = vst [vmem:[#allocation0] sm:%s3] %v78
    %v80 = vld [vmem:[#allocation0] ss:$8 sm:$0xf]
    %v81 = vld [vmem:[#allocation0] ss:$8 sm:$0xf0]
    %vm82 = vcmask 1047556
    %v83 = vsel %vm82, %v81, %v80
    %vm84 = vcmask 64512
    %85 = vst.msk [vmem:[%s1] sm:$0xff] %vm84, %v83
    %s86 = scalar_lea.vmem [#allocation0], 64
    %v87 = vld [vmem:[%s86] ss:$8 sm:$0xf]
    %s88 = scalar_lea.vmem [#allocation0], 64
    %v89 = vld [vmem:[%s88] ss:$8 sm:$0xf0]
    %vm90 = vcmask 1047556
    %v91 = vsel %vm90, %v89, %v87
    %vm92 = vcmask 64512
    %s93 = scalar_lea.vmem %s1, 8
    %94 = vst.msk [vmem:[%s93] sm:$0xff] %vm92, %v91
    %s95 = scalar_lea.vmem [#allocation0], 3
    %v96 = vld [vmem:[%s95] ss:$8 sm:$0xf]
    %s97 = scalar_lea.vmem [#allocation0], 3
    %v98 = vld [vmem:[%s97] ss:$8 sm:$0xf0]
    %vm99 = vcmask 1047556
    %v100 = vsel %vm99, %v98, %v96
    %101 = vrot.lane.b32.xlu0 %v100, 24
    %v102 = vpop.permute.xlu0 %101
    %vm103 = vcmask 261312
    %104 = vst.msk [vmem:[%s1] sm:$0xff] %vm103, %v102
    %s105 = scalar_lea.vmem [#allocation0], 67
    %v106 = vld [vmem:[%s105] ss:$8 sm:$0xf]
    %s107 = scalar_lea.vmem [#allocation0], 67
    %v108 = vld [vmem:[%s107] ss:$8 sm:$0xf0]
    %vm109 = vcmask 1047556
    %v110 = vsel %vm109, %v108, %v106
    %111 = vrot.lane.b32.xlu0 %v110, 24
    %v112 = vpop.permute.xlu0 %111
    %vm113 = vcmask 261312
    %s114 = scalar_lea.vmem %s1, 8
    %115 = vst.msk [vmem:[%s114] sm:$0xff] %vm113, %v112
    %s116 = scalar_lea.vmem [#allocation0], 2
    %v117 = vld [vmem:[%s116] ss:$8 sm:$0xf]
    %s118 = scalar_lea.vmem [#allocation0], 2
    %v119 = vld [vmem:[%s118] ss:$8 sm:$0xf0]
    %vm120 = vcmask 1047556
    %v121 = vsel %vm120, %v119, %v117
    %122 = vrot.lane.b32.xlu0 %v121, 16
    %v123 = vpop.permute.xlu0 %122
    %vm124 = vcmask 195712
    %125 = vst.msk [vmem:[%s1] sm:$0xff] %vm124, %v123
    %s126 = scalar_lea.vmem [#allocation0], 66
    %v127 = vld [vmem:[%s126] ss:$8 sm:$0xf]
    %s128 = scalar_lea.vmem [#allocation0], 66
    %v129 = vld [vmem:[%s128] ss:$8 sm:$0xf0]
    %vm130 = vcmask 1047556
    %v131 = vsel %vm130, %v129, %v127
    %132 = vrot.lane.b32.xlu0 %v131, 16
    %v133 = vpop.permute.xlu0 %132
    %vm134 = vcmask 195712
    %s135 = scalar_lea.vmem %s1, 8
    %136 = vst.msk [vmem:[%s135] sm:$0xff] %vm134, %v133
    %s137 = scalar_lea.vmem [#allocation0], 1
    %v138 = vld [vmem:[%s137] ss:$8 sm:$0xf]
    %s139 = scalar_lea.vmem [#allocation0], 1
    %v140 = vld [vmem:[%s139] ss:$8 sm:$0xf0]
    %vm141 = vcmask 1047556
    %v142 = vsel %vm141, %v140, %v138
    %143 = vrot.lane.b32.xlu0 %v142, 8
    %v144 = vpop.permute.xlu0 %143
    %vm145 = vcmask 130112
    %146 = vst.msk [vmem:[%s1] sm:$0xff] %vm145, %v144
    %s147 = scalar_lea.vmem [#allocation0], 65
    %v148 = vld [vmem:[%s147] ss:$8 sm:$0xf]
    %s149 = scalar_lea.vmem [#allocation0], 65
    %v150 = vld [vmem:[%s149] ss:$8 sm:$0xf0]
    %vm151 = vcmask 1047556
    %v152 = vsel %vm151, %v150, %v148
    %153 = vrot.lane.b32.xlu0 %v152, 8
    %v154 = vpop.permute.xlu0 %153
    %vm155 = vcmask 130112
    %s156 = scalar_lea.vmem %s1, 8
    %157 = vst.msk [vmem:[%s156] sm:$0xff] %vm155, %v154

// kernel: internlm_decoder_layer.1
$region0: #{internlm_decoder_layer.1}
  #allocation0 [shape = 'u32[]', space=smem, size = 0x4, offset = 0x4, fixed_abs, tag = 'smem constant byte address 0x4 - core index']
  #allocation1 [shape = 'u32[144,128]{1,0:T(1,128)}', space=vmem, size = 0x12000, scoped, tag = 'internal scratch']
  %s0 = inlined_call_operand.vmem [shape: f32[16,128], index: 0, kind: input, shape index: {}, may-alias: {0,5}]
  %s1 = inlined_call_operand.vmem [shape: f32[16,128], index: 1, kind: input, shape index: {}]
  %s2 = inlined_call_operand.vmem [shape: f32[40,128], index: 2, kind: input, shape index: {}]
  %s3 = inlined_call_operand.vmem [shape: bf16[352,256], index: 3, kind: input, shape index: {}]
  %s4 = inlined_call_operand.vmem [shape: f32[8,256], index: 4, kind: input, shape index: {}]
  %s5 = inlined_call_operand.vmem [shape: f32[16,128], index: 5, kind: output, shape index: {}, may-alias: {0,5}]
  %s6 = sld [smem:[#allocation0]]
  $region53: #{internlm_decoder_layer.1} parent=0
    _
  %s8 = ssub.s32 1, %s6
  %s9 = scalar_select 0, %s8, %s6
  loop: start=0, step=1, limit=4
  $region2: #{internlm_decoder_layer.1} parent=0 // loop_pre_header
    _
  $region3: #{internlm_decoder_layer.1} parent=0 // loop_header
    %s11 = sphi 0, %s15
    %p12 = scmp.ge.s32.totalorder %s11, 4
    %s21 = sphi 0, %s23
    %s24 = sphi 0, %s21
    %s25 = sphi 0, %s24
    %s41 = sphi 0, %s25
    %s47 = sphi 0, %s49
    %s50 = sphi 0, %s47
    %s51 = sphi 0, %s50
    %s67 = sphi 0, %s51
    %s71 = sphi 0, %s71
    %s73 = sphi 0, %s71
    %s74 = sphi 0, %s73
    %s88 = sphi 0, %s74
    %s92 = sphi 0, %s92
    %s94 = sphi 0, %s92
    %s95 = sphi 0, %s94
    %s109 = sphi 0, %s95
    %s113 = sphi 0, %s113
    %s115 = sphi 0, %s113
    %s116 = sphi 0, %s115
    %s130 = sphi 0, %s116
    %s136 = sphi 0, %s138
    %s139 = sphi 0, %s136
    %s140 = sphi 0, %s139
    %s156 = sphi 0, %s140
  $region4: #{internlm_decoder_layer.1} parent=0 // loop_header_branch
    %14 = sbr.rel (%p12) target = $region8
  $region5: #{internlm_decoder_layer.1} parent=0 // loop_body
    %s16 = ssub.s32 %s11, 1
    %s17 = ssub.s32 %s11, 2
    %s18 = sadd.s32 %s11, 1
    %s19 = ssub.s32 %s11, %s18
    %p20 = scmp.eq.s32.totalorder %s19, 0
    %s22 = sadd.s32 %s21, 1
    %s23 = scalar_select %p20, %s21, %s22
    %p26 = pneg %p20
    %p27 = scmp.eq.s32.totalorder %s11, 1
    %p28 = por %p26, %p27
    %p29 = scmp.ne.s32.totalorder %s21, %s24
    %p30 = scmp.eq.s32.totalorder %s11, 0
    %p31 = por %p29, %p30
    %p32 = scmp.ne.s32.totalorder %s21, %s24
    %p33 = scmp.eq.s32.totalorder %s16, 1
    %p34 = por %p32, %p33
    %p35 = scmp.ne.s32.totalorder %s24, %s25
    %p36 = scmp.eq.s32.totalorder %s16, 0
    %p37 = por %p35, %p36
    %p38 = scmp.ne.s32.totalorder %s24, %s25
    %p39 = scmp.eq.s32.totalorder %s17, 1
    %p40 = por %p38, %p39
    %p42 = scmp.ne.s32.totalorder %s25, %s41
    %p43 = scmp.eq.s32.totalorder %s17, 0
    %p44 = por %p42, %p43
    %s45 = ssub.s32 %s11, %s18
    %p46 = scmp.eq.s32.totalorder %s45, 0
    %s48 = sadd.s32 %s47, 1
    %s49 = scalar_select %p46, %s47, %s48
    %p52 = pneg %p46
    %p53 = scmp.eq.s32.totalorder %s11, 1
    %p54 = por %p52, %p53
    %p55 = scmp.ne.s32.totalorder %s47, %s50
    %p56 = scmp.eq.s32.totalorder %s11, 0
    %p57 = por %p55, %p56
    %p58 = scmp.ne.s32.totalorder %s47, %s50
    %p59 = scmp.eq.s32.totalorder %s16, 1
    %p60 = por %p58, %p59
    %p61 = scmp.ne.s32.totalorder %s50, %s51
    %p62 = scmp.eq.s32.totalorder %s16, 0
    %p63 = por %p61, %p62
    %p64 = scmp.ne.s32.totalorder %s50, %s51
    %p65 = scmp.eq.s32.totalorder %s17, 1
    %p66 = por %p64, %p65
    %p68 = scmp.ne.s32.totalorder %s51, %s67
    %p69 = scmp.eq.s32.totalorder %s17, 0
    %p70 = por %p68, %p69
    %s72 = sadd.s32 %s71, 1
    %p75 = scmp.eq.s32.totalorder %s11, 1
    %p76 = scmp.ne.s32.totalorder %s71, %s73
    %p77 = scmp.eq.s32.totalorder %s11, 0
    %p78 = por %p76, %p77
    %p79 = scmp.ne.s32.totalorder %s71, %s73
    %p80 = scmp.eq.s32.totalorder %s16, 1
    %p81 = por %p79, %p80
    %p82 = scmp.ne.s32.totalorder %s73, %s74
    %p83 = scmp.eq.s32.totalorder %s16, 0
    %p84 = por %p82, %p83
    %p85 = scmp.ne.s32.totalorder %s73, %s74
    %p86 = scmp.eq.s32.totalorder %s17, 1
    %p87 = por %p85, %p86
    %p89 = scmp.ne.s32.totalorder %s74, %s88
    %p90 = scmp.eq.s32.totalorder %s17, 0
    %p91 = por %p89, %p90
    %s93 = sadd.s32 %s92, 1
    %p96 = scmp.eq.s32.totalorder %s11, 1
    %p97 = scmp.ne.s32.totalorder %s92, %s94
    %p98 = scmp.eq.s32.totalorder %s11, 0
    %p99 = por %p97, %p98
    %p100 = scmp.ne.s32.totalorder %s92, %s94
    %p101 = scmp.eq.s32.totalorder %s16, 1
    %p102 = por %p100, %p101
    %p103 = scmp.ne.s32.totalorder %s94, %s95
    %p104 = scmp.eq.s32.totalorder %s16, 0
    %p105 = por %p103, %p104
    %p106 = scmp.ne.s32.totalorder %s94, %s95
    %p107 = scmp.eq.s32.totalorder %s17, 1
    %p108 = por %p106, %p107
    %p110 = scmp.ne.s32.totalorder %s95, %s109
    %p111 = scmp.eq.s32.totalorder %s17, 0
    %p112 = por %p110, %p111
    %s114 = sadd.s32 %s113, 1
    %p117 = scmp.eq.s32.totalorder %s11, 1
    %p118 = scmp.ne.s32.totalorder %s113, %s115
    %p119 = scmp.eq.s32.totalorder %s11, 0
    %p120 = por %p118, %p119
    %p121 = scmp.ne.s32.totalorder %s113, %s115
    %p122 = scmp.eq.s32.totalorder %s16, 1
    %p123 = por %p121, %p122
    %p124 = scmp.ne.s32.totalorder %s115, %s116
    %p125 = scmp.eq.s32.totalorder %s16, 0
    %p126 = por %p124, %p125
    %p127 = scmp.ne.s32.totalorder %s115, %s116
    %p128 = scmp.eq.s32.totalorder %s17, 1
    %p129 = por %p127, %p128
    %p131 = scmp.ne.s32.totalorder %s116, %s130
    %p132 = scmp.eq.s32.totalorder %s17, 0
    %p133 = por %p131, %p132
    %s134 = ssub.s32 %s11, %s18
    %p135 = scmp.eq.s32.totalorder %s134, 0
    %s137 = sadd.s32 %s136, 1
    %s138 = scalar_select %p135, %s136, %s137
    %p141 = pneg %p135
    %p142 = scmp.eq.s32.totalorder %s11, 1
    %p143 = por %p141, %p142
    %p144 = scmp.ne.s32.totalorder %s136, %s139
    %p145 = scmp.eq.s32.totalorder %s11, 0
    %p146 = por %p144, %p145
    %p147 = scmp.ne.s32.totalorder %s136, %s139
    %p148 = scmp.eq.s32.totalorder %s16, 1
    %p149 = por %p147, %p148
    %p150 = scmp.ne.s32.totalorder %s139, %s140
    %p151 = scmp.eq.s32.totalorder %s16, 0
    %p152 = por %p150, %p151
    %p153 = scmp.ne.s32.totalorder %s139, %s140
    %p154 = scmp.eq.s32.totalorder %s17, 1
    %p155 = por %p153, %p154
    %p157 = scmp.ne.s32.totalorder %s140, %s156
    %p158 = scmp.eq.s32.totalorder %s17, 0
    %p159 = por %p157, %p158
    %p160 = scmp.le.s32.totalorder 1, %s11
    %p161 = scmp.lt.s32.totalorder %s11, 3
    %p162 = pnand %p160, %p161
    %p163 = pneg %p162
    // Predicated region
    $region9: #{internlm_decoder_layer.1} parent=5 // pred_check
      _
    $region10: #{internlm_decoder_layer.1} parent=5 // pred_check_branch
      %165 = sbr.rel (%p162) target = $region12
    $region11: #{internlm_decoder_layer.1} parent=5 // pred_region
      %s166 = ssub.s32 %s11, 1
      // Predicated region
      $region13: #{internlm_decoder_layer.1} parent=11 // pred_check
        %p167 = pneg %p84
      $region14: #{internlm_decoder_layer.1} parent=11 // pred_check_branch
        %169 = sbr.rel (%p167) target = $region16
      $region15: #{internlm_decoder_layer.1} parent=11 // pred_region
        _
      $region16: #{internlm_decoder_layer.1} parent=11 // pred_fallthru
        _
      // Predicated region
      $region17: #{internlm_decoder_layer.1} parent=11 // pred_check
        %p170 = pneg %p105
      $region18: #{internlm_decoder_layer.1} parent=11 // pred_check_branch
        %172 = sbr.rel (%p170) target = $region20
      $region19: #{internlm_decoder_layer.1} parent=11 // pred_region
        _
      $region20: #{internlm_decoder_layer.1} parent=11 // pred_fallthru
        _
      // Predicated region
      $region21: #{internlm_decoder_layer.1} parent=11 // pred_check
        %p173 = pneg %p126
      $region22: #{internlm_decoder_layer.1} parent=11 // pred_check_branch
        %175 = sbr.rel (%p173) target = $region24
      $region23: #{internlm_decoder_layer.1} parent=11 // pred_region
        _
      $region24: #{internlm_decoder_layer.1} parent=11 // pred_fallthru
        _
    $region12: #{internlm_decoder_layer.1} parent=5 // pred_fallthru
      _
    %p176 = scmp.lt.s32.totalorder %s11, 2
    // Predicated region
    $region25: #{internlm_decoder_layer.1} parent=5 // pred_check
      %p177 = pneg %p176
    $region26: #{internlm_decoder_layer.1} parent=5 // pred_check_branch
      %179 = sbr.rel (%p177) target = $region28
    $region27: #{internlm_decoder_layer.1} parent=5 // pred_region
      // Predicated region
      $region29: #{internlm_decoder_layer.1} parent=27 // pred_check
        %p180 = pneg %p31
      $region30: #{internlm_decoder_layer.1} parent=27 // pred_check_branch
        %182 = sbr.rel (%p180) target = $region32
      $region31: #{internlm_decoder_layer.1} parent=27 // pred_region
        %p183 = scmp.lt.s32.totalorder %s11, 1
        %s184 = scalar_select %p183, %s11, 1
        %s185 = smul.addr %s184, 8
        %s186 = scalar_lea.vmem %s0, %s185
      $region32: #{internlm_decoder_layer.1} parent=27 // pred_fallthru
        _
      // Predicated region
      $region33: #{internlm_decoder_layer.1} parent=27 // pred_check
        %p187 = pneg %p57
      $region34: #{internlm_decoder_layer.1} parent=27 // pred_check_branch
        %189 = sbr.rel (%p187) target = $region36
      $region35: #{internlm_decoder_layer.1} parent=27 // pred_region
        %p190 = scmp.lt.s32.totalorder %s11, 1
        %s191 = scalar_select %p190, %s11, 1
        %s192 = smul.addr %s191, 8
        %s193 = scalar_lea.vmem %s1, %s192
      $region36: #{internlm_decoder_layer.1} parent=27 // pred_fallthru
        _
    $region28: #{internlm_decoder_layer.1} parent=5 // pred_fallthru
      _
    %p194 = scmp.le.s32.totalorder 1, %s11
    %p195 = scmp.lt.s32.totalorder %s11, 3
    %p196 = pnand %p194, %p195
    %p197 = pneg %p196
    // Predicated region
    $region37: #{internlm_decoder_layer.1} parent=5 // pred_check
      _
    $region38: #{internlm_decoder_layer.1} parent=5 // pred_check_branch
      %199 = sbr.rel (%p196) target = $region40
    $region39: #{internlm_decoder_layer.1} parent=5 // pred_region
      %s200 = ssub.s32 %s11, 1
      %p201 = scmp.lt.s32.totalorder %s16, 1
      %s202 = scalar_select %p201, %s16, 1
      %s203 = smul.addr %s202, 8
      %s204 = scalar_lea.vmem %s0, %s203
      %p205 = pneg %p37
      %p206 = pneg %p34
      %p207 = scmp.lt.s32.totalorder %s16, 1
      %s208 = scalar_select %p207, %s16, 1
      %s209 = smul.addr %s208, 8
      %s210 = scalar_lea.vmem %s1, %s209
      %p211 = pneg %p63
      %p212 = pneg %p60
      %p213 = pneg %p84
      %p214 = pneg %p81
      %p215 = pneg %p105
      %p216 = pneg %p102
      %p217 = pneg %p126
      %p218 = pneg %p123
      %p219 = pneg %p152
      %p220 = pneg %p149
      %p221 = scmp.lt.s32.totalorder %s16, 1
      %s222 = scalar_select %p221, %s16, 1
      %s223 = smul.addr %s222, 8
      %s224 = scalar_lea.vmem %s5, %s223
      %p225 = scmp.lt.s32.totalorder %s16, 1
      %s226 = scalar_select %p225, %s16, 1
      %s227 = smul.addr %s226, 8
      %s228 = scalar_lea.vmem %s0, %s227
      %p229 = scmp.lt.s32.totalorder %s16, 1
      %s230 = scalar_select %p229, %s16, 1
      %s231 = smul.addr %s230, 8
      %s232 = scalar_lea.vmem %s1, %s231
      %p233 = scmp.lt.s32.totalorder %s16, 1
      %s234 = scalar_select %p233, %s16, 1
      %s235 = smul.addr %s234, 8
      %s236 = scalar_lea.vmem %s5, %s235
      %v238 = vld [vmem:[%s228] sm:$0xff]
      %v239 = vld [vmem:[%s4] ss:$8 sm:$0x3]
      %v240 = vld [vmem:[%s4 + $0x1] ss:$0 sm:$0xff]
      %v241 = vld [vmem:[%s4 + $0x2] ss:$0 sm:$0xff]
      %v242 = vld [vmem:[%s4 + $0x3] ss:$0 sm:$0xff]
      %v243 = vmul.f32 %v238, %v238
      %244 = vadd.xlane.f32.xlu0 %v243
      %v245 = vpop.xlane.xlu0 %244
      %v246 = vmul.f32 %v245, 0.03125
      %v247 = vadd.f32 %v246, 1e-06
      %v248 = vrsqrt.pop %v247
      %v249 = vmul.f32 %v238, %v248
      %v250 = vmul.f32 %v241, %v249
      %v251 = vpack.c.bf16 %v250, %v250
      %v252 = vld [vmem:[%s3] sm:$0xff]
      %v253 = vld [vmem:[%s3 + $0x8] sm:$0xff]
      %v254 = vld [vmem:[%s3 + $0x10] sm:$0xff]
      %v255 = vld [vmem:[%s3 + $0x18] sm:$0xff]
      %v256 = vld [vmem:[%s3 + $0x20] sm:$0xff]
      %v257 = vld [vmem:[%s3 + $0x28] sm:$0xff]
      %v258 = vld [vmem:[%s3 + $0x30] sm:$0xff]
      %v259 = vld [vmem:[%s3 + $0x38] sm:$0xff]
      %v260 = vld [vmem:[%s3 + $0x40] sm:$0xff]
      %v261 = vld [vmem:[%s3 + $0x48] sm:$0xff]
      %v262 = vld [vmem:[%s3 + $0x50] sm:$0xff]
      %v263 = vld [vmem:[%s3 + $0x58] sm:$0xff]
      %v264 = vld [vmem:[%s3 + $0x60] sm:$0xff]
      %v265 = vld [vmem:[%s3 + $0x68] sm:$0xff]
      %v266 = vld [vmem:[%s3 + $0x70] sm:$0xff]
      %v267 = vld [vmem:[%s3 + $0x78] sm:$0xff]
      %v269 = vlaneseq
      %v270 = vshrl.u32 %v269, 7
      %v271 = vsub.s32 0, %v270
      %v272 = vrot.slane %v239, %v271
      %v273 = vlaneseq
      %v274 = vshrl.u32 %v273, 7
      %v275 = vsub.s32 1, %v274
      %v276 = vrot.slane %v239, %v275
      %v295 = vunpack.c.l.b16 %v252
      %v296 = vunpack.c.h.b16 %v252
      %v297 = vunpack.c.l.b16 %v253
      %v298 = vunpack.c.h.b16 %v253
      %v299 = vunpack.c.l.b16 %v254
      %v300 = vunpack.c.h.b16 %v254
      %v301 = vunpack.c.l.b16 %v255
      %v302 = vunpack.c.h.b16 %v255
      %v303 = vunpack.c.l.b16 %v256
      %v304 = vunpack.c.h.b16 %v256
      %v305 = vunpack.c.l.b16 %v257
      %v306 = vunpack.c.h.b16 %v257
      %v307 = vunpack.c.l.b16 %v258
      %v308 = vunpack.c.h.b16 %v258
      %v309 = vunpack.c.l.b16 %v259
      %v310 = vunpack.c.h.b16 %v259
      %v311 = vunpack.c.l.b16 %v260
      %v312 = vunpack.c.h.b16 %v260
      %v313 = vunpack.c.l.b16 %v261
      %v314 = vunpack.c.h.b16 %v261
      %v315 = vunpack.c.l.b16 %v262
      %v316 = vunpack.c.h.b16 %v262
      %v317 = vunpack.c.l.b16 %v263
      %v318 = vunpack.c.h.b16 %v263
      %v319 = vunpack.c.l.b16 %v264
      %v320 = vunpack.c.h.b16 %v264
      %v321 = vunpack.c.l.b16 %v265
      %v322 = vunpack.c.h.b16 %v265
      %v323 = vunpack.c.l.b16 %v266
      %v324 = vunpack.c.h.b16 %v266
      %v325 = vunpack.c.l.b16 %v267
      %v326 = vunpack.c.h.b16 %v267
      %v327 = vpack.c.b16 %v297, %v295
      %v328 = vpack.c.b16 %v298, %v296
      %v329 = vpack.c.b16 %v301, %v299
      %v330 = vpack.c.b16 %v302, %v300
      %v331 = vpack.c.b16 %v305, %v303
      %v332 = vpack.c.b16 %v306, %v304
      %v333 = vpack.c.b16 %v309, %v307
      %v334 = vpack.c.b16 %v310, %v308
      %v335 = vpack.c.b16 %v313, %v311
      %v336 = vpack.c.b16 %v314, %v312
      %v337 = vpack.c.b16 %v317, %v315
      %v338 = vpack.c.b16 %v318, %v316
      %v339 = vpack.c.b16 %v321, %v319
      %v340 = vpack.c.b16 %v322, %v320
      %v341 = vpack.c.b16 %v325, %v323
      %v342 = vpack.c.b16 %v326, %v324
      %359 = vmatprep.subr.bf16.mxu0 %v328
      %360 = vmatpush1.bf16.msra.mxu0 %v327
      %361 = vmatprep.subr.bf16.mxu0 %v330
      %362 = vmatpush1.bf16.msra.mxu0 %v329
      %363 = vmatprep.subr.bf16.mxu0 %v332
      %364 = vmatpush1.bf16.msra.mxu0 %v331
      %365 = vmatprep.subr.bf16.mxu0 %v334
      %366 = vmatpush1.bf16.msra.mxu0 %v333
      %367 = vmatprep.subr.bf16.mxu0 %v336
      %368 = vmatpush1.bf16.msra.mxu0 %v335
      %369 = vmatprep.subr.bf16.mxu0 %v338
      %370 = vmatpush1.bf16.msra.mxu0 %v337
      %371 = vmatprep.subr.bf16.mxu0 %v340
      %372 = vmatpush1.bf16.msra.mxu0 %v339
      %373 = vmatprep.subr.bf16.mxu0 %v342
      %374 = vmatpush1.bf16.msra.mxu0 %v341
      %375 = vmatprep.subr.bf16.mxu0 0
      %376 = vmatpush1.bf16.msra.mxu0 0
      %377 = vmatprep.subr.bf16.mxu0 0
      %378 = vmatpush1.bf16.msra.mxu0 0
      %379 = vmatprep.subr.bf16.mxu0 0
      %380 = vmatpush1.bf16.msra.mxu0 0
      %381 = vmatprep.subr.bf16.mxu0 0
      %382 = vmatpush1.bf16.msra.mxu0 0
      %383 = vmatprep.subr.bf16.mxu0 0
      %384 = vmatpush1.bf16.msra.mxu0 0
      %385 = vmatprep.subr.bf16.mxu0 0
      %386 = vmatpush1.bf16.msra.mxu0 0
      %387 = vmatprep.subr.bf16.mxu0 0
      %388 = vmatpush1.bf16.msra.mxu0 0
      %389 = vmatprep.subr.bf16.mxu0 0
      %390 = vmatpush1.bf16.msra.mxu0 0
      %391 = vmatprep.mubr.bf16.mxu0 0
      %392 = vmatmul.mubr.bf16.gmra.mrb[0].mxu0 %v251
      %v393 = vpop.f32.mrb[0].mxu0
      %v394 = vadd.f32 %v272, %v393
      %v395 = vpop.f32.mrb[0].mxu0
      %v396 = vadd.f32 %v276, %v395
      %v397 = vpop.f32.mrb[0].mxu0
      %v398 = vpop.f32.mrb[0].mxu0
      %399 = vdwg.mxu0
      %v400 = vld [vmem:[%s232] sm:$0xff]
      %402 = vrot.lane.b32.xlu0 %v400, 96
      %v403 = vpop.permute.xlu0 %402
      %v405 = vmul.f32 %v394, %v403
      %407 = vrot.lane.b32.xlu0 %v405, 96
      %v408 = vpop.permute.xlu0 %407
      %v410 = vadd.f32 %v405, %v408
      %411 = vrot.lane.b32.xlu0 %v400, 32
      %v412 = vpop.permute.xlu0 %411
      %v414 = vmul.f32 %v394, %v412
      %416 = vrot.lane.b32.xlu0 %v414, 96
      %v417 = vpop.permute.xlu0 %416
      %v419 = vadd.f32 %v414, %v417
      %v420 = vld [vmem:[%s2] sm:$0xff]
      %v421 = vld [vmem:[%s2 + $0x8] sm:$0xff]
      %v422 = vld [vmem:[%s2 + $0x10] sm:$0xff]
      %v423 = vld [vmem:[%s2 + $0x18] sm:$0xff]
      %v424 = vld [vmem:[%s2 + $0x20] sm:$0xf]
      %429 = vrot.lane.b32.xlu0 %v420, 64
      %v430 = vpop.permute.xlu0 %429
      %431 = vrot.lane.b32.xlu0 %v421, 64
      %v432 = vpop.permute.xlu0 %431
      %433 = vrot.lane.b32.xlu0 %v422, 64
      %v434 = vpop.permute.xlu0 %433
      %435 = vrot.lane.b32.xlu0 %v423, 64
      %v436 = vpop.permute.xlu0 %435
      %v441 = vmul.f32 %v419, %v430
      %v442 = vmul.f32 %v419, %v432
      %v443 = vmul.f32 %v419, %v434
      %v444 = vmul.f32 %v419, %v436
      %v445 = vmul.f32 %v396, %v420
      %v446 = vmul.f32 %v396, %v421
      %v447 = vmul.f32 %v396, %v422
      %v448 = vmul.f32 %v396, %v423
      %v449 = vpack.c.bf16 %v410, %v410
      %v450 = vpack.c.bf16 %v442, %v441
      %v451 = vpack.c.bf16 %v444, %v443
      %454 = vrot.lane.b32.xlu0 %v450, 64
      %v455 = vpop.permute.xlu0 %454
      %456 = vrot.lane.b32.xlu0 %v451, 64
      %v457 = vpop.permute.xlu0 %456
      %vm458 = vcmask 261120
      %v460 = vsel %vm458, %v449, 0
      %v463 = vsel %vm458, %v455, 0
      %v466 = vsel %vm458, %v457, 0
      %468 = vmatprep.subr.bf16.mxu0 0
      %469 = vmatpush1.bf16.xpose.msra.mxu0 %v463
      %470 = vmatprep.subr.bf16.mxu0 0
      %471 = vmatpush1.bf16.xpose.msra.mxu0 %v466
      %472 = vmatprep.subr.bf16.mxu0 0
      %473 = vmatpush1.bf16.xpose.msra.mxu0 0
      %474 = vmatprep.subr.bf16.mxu0 0
      %475 = vmatpush1.bf16.xpose.msra.mxu0 0
      %476 = vmatprep.subr.bf16.mxu0 0
      %477 = vmatpush1.bf16.xpose.msra.mxu0 0
      %478 = vmatprep.subr.bf16.mxu0 0
      %479 = vmatpush1.bf16.xpose.msra.mxu0 0
      %480 = vmatprep.subr.bf16.mxu0 0
      %481 = vmatpush1.bf16.xpose.msra.mxu0 0
      %482 = vmatprep.subr.bf16.mxu0 0
      %483 = vmatpush1.bf16.xpose.msra.mxu0 0
      %484 = vmatprep.subr.bf16.mxu0 0
      %485 = vmatpush1.bf16.xpose.msra.mxu0 0
      %486 = vmatprep.subr.bf16.mxu0 0
      %487 = vmatpush1.bf16.xpose.msra.mxu0 0
      %488 = vmatprep.subr.bf16.mxu0 0
      %489 = vmatpush1.bf16.xpose.msra.mxu0 0
      %490 = vmatprep.subr.bf16.mxu0 0
      %491 = vmatpush1.bf16.xpose.msra.mxu0 0
      %492 = vmatprep.subr.bf16.mxu0 0
      %493 = vmatpush1.bf16.xpose.msra.mxu0 0
      %494 = vmatprep.subr.bf16.mxu0 0
      %495 = vmatpush1.bf16.xpose.msra.mxu0 0
      %496 = vmatprep.subr.bf16.mxu0 0
      %497 = vmatpush1.bf16.xpose.msra.mxu0 0
      %498 = vmatprep.subr.bf16.mxu0 0
      %499 = vmatpush1.bf16.xpose.msra.mxu0 0
      %500 = vmatprep.mubr.bf16.mxu0 0
      %501 = vmatmul.mubr.bf16.gmra.mrb[0].mxu0 %v460
      %v502 = vpop.f32.mrb[0].mxu0
      %v503 = vadd.f32 %v400, %v502
      %v504 = vpop.f32.mrb[0].mxu0
      %v505 = vpop.f32.mrb[0].mxu0
      %v506 = vpop.f32.mrb[0].mxu0
      %507 = vdwg.mxu0
      %v508 = vsel %vm458, %v503, -inf
      %509 = vmax.xlane.f32.xlu0 %v508
      %v510 = vpop.xlane.xlu0 %509
      %v511 = vsub.f32 %v503, %v510
      %v512 = vmul.f32 %v511, 1.442695
      %v513 = vpow.pop %v512
      %v514 = vpack.c.bf16 %v513, %v513
      %v515 = vpack.c.bf16 %v446, %v445
      %v516 = vpack.c.bf16 %v448, %v447
      %v518 = vsel %vm458, %v514, 0
      %520 = vmatprep.subr.bf16.mxu0 0
      %521 = vmatpush1.bf16.msra.mxu0 %v515
      %522 = vmatprep.subr.bf16.mxu0 0
      %523 = vmatpush1.bf16.msra.mxu0 %v516
      %524 = vmatprep.subr.bf16.mxu0 0
      %525 = vmatpush1.bf16.msra.mxu0 0
      %526 = vmatprep.subr.bf16.mxu0 0
      %527 = vmatpush1.bf16.msra.mxu0 0
      %528 = vmatprep.subr.bf16.mxu0 0
      %529 = vmatpush1.bf16.msra.mxu0 0
      %530 = vmatprep.subr.bf16.mxu0 0
      %531 = vmatpush1.bf16.msra.mxu0 0
      %532 = vmatprep.subr.bf16.mxu0 0
      %533 = vmatpush1.bf16.msra.mxu0 0
      %534 = vmatprep.subr.bf16.mxu0 0
      %535 = vmatpush1.bf16.msra.mxu0 0
      %536 = vmatprep.subr.bf16.mxu0 0
      %537 = vmatpush1.bf16.msra.mxu0 0
      %538 = vmatprep.subr.bf16.mxu0 0
      %539 = vmatpush1.bf16.msra.mxu0 0
      %540 = vmatprep.subr.bf16.mxu0 0
      %541 = vmatpush1.bf16.msra.mxu0 0
      %542 = vmatprep.subr.bf16.mxu0 0
      %543 = vmatpush1.bf16.msra.mxu0 0
      %544 = vmatprep.subr.bf16.mxu0 0
      %545 = vmatpush1.bf16.msra.mxu0 0
      %546 = vmatprep.subr.bf16.mxu0 0
      %547 = vmatpush1.bf16.msra.mxu0 0
      %548 = vmatprep.subr.bf16.mxu0 0
      %549 = vmatpush1.bf16.msra.mxu0 0
      %550 = vmatprep.subr.bf16.mxu0 0
      %551 = vmatpush1.bf16.msra.mxu0 0
      %552 = vmatprep.mubr.bf16.mxu0 0
      %553 = vmatmul.mubr.bf16.gmra.mrb[0].mxu0 %v518
      %v554 = vpop.f32.mrb[0].mxu0
      %v555 = vadd.f32 0.0, %v554
      %v556 = vpop.f32.mrb[0].mxu0
      %v557 = vpop.f32.mrb[0].mxu0
      %v558 = vpop.f32.mrb[0].mxu0
      %559 = vdwg.mxu0
      %v560 = vrcp.pop %v555
      %562 = vrot.lane.b32.xlu0 %v560, 96
      %v563 = vpop.permute.xlu0 %562
      %vm564 = vcmask 31744
      %v565 = vsel %vm564, %v563, 0
      %vm567 = vcmask 1043456
      %v569 = vsel %vm567, %v424, 0
      %571 = vmatprep.subr.mxu0 0.0
      %572 = vmatpush1.msra.mxu0 %v569
      %573 = vmatprep.subr.mxu0 0.0
      %574 = vmatpush1.msra.mxu0 0.0
      %575 = vmatprep.subr.mxu0 0.0
      %576 = vmatpush1.msra.mxu0 0.0
      %577 = vmatprep.subr.mxu0 0.0
      %578 = vmatpush1.msra.mxu0 0.0
      %579 = vmatprep.subr.mxu0 0.0
      %580 = vmatpush1.msra.mxu0 0.0
      %581 = vmatprep.subr.mxu0 0.0
      %582 = vmatpush1.msra.mxu0 0.0
      %583 = vmatprep.subr.mxu0 0.0
      %584 = vmatpush1.msra.mxu0 0.0
      %585 = vmatprep.subr.mxu0 0.0
      %586 = vmatpush1.msra.mxu0 0.0
      %587 = vmatprep.subr.mxu0 0.0
      %588 = vmatpush1.msra.mxu0 0.0
      %589 = vmatprep.subr.mxu0 0.0
      %590 = vmatpush1.msra.mxu0 0.0
      %591 = vmatprep.subr.mxu0 0.0
      %592 = vmatpush1.msra.mxu0 0.0
      %593 = vmatprep.subr.mxu0 0.0
      %594 = vmatpush1.msra.mxu0 0.0
      %595 = vmatprep.subr.mxu0 0.0
      %596 = vmatpush1.msra.mxu0 0.0
      %597 = vmatprep.subr.mxu0 0.0
      %598 = vmatpush1.msra.mxu0 0.0
      %599 = vmatprep.subr.mxu0 0.0
      %600 = vmatpush1.msra.mxu0 0.0
      %601 = vmatprep.subr.mxu0 0.0
      %602 = vmatpush1.msra.mxu0 0.0
      %603 = vmatprep.subr.mxu0 0.0
      %604 = vmatpush1.msra.mxu0 0.0
      %605 = vmatprep.subr.mxu0 0.0
      %606 = vmatpush1.msra.mxu0 0.0
      %607 = vmatprep.subr.mxu0 0.0
      %608 = vmatpush1.msra.mxu0 0.0
      %609 = vmatprep.subr.mxu0 0.0
      %610 = vmatpush1.msra.mxu0 0.0
      %611 = vmatprep.subr.mxu0 0.0
      %612 = vmatpush1.msra.mxu0 0.0
      %613 = vmatprep.subr.mxu0 0.0
      %614 = vmatpush1.msra.mxu0 0.0
      %615 = vmatprep.subr.mxu0 0.0
      %616 = vmatpush1.msra.mxu0 0.0
      %617 = vmatprep.subr.mxu0 0.0
      %618 = vmatpush1.msra.mxu0 0.0
      %619 = vmatprep.subr.mxu0 0.0
      %620 = vmatpush1.msra.mxu0 0.0
      %621 = vmatprep.subr.mxu0 0.0
      %622 = vmatpush1.msra.mxu0 0.0
      %623 = vmatprep.subr.mxu0 0.0
      %624 = vmatpush1.msra.mxu0 0.0
      %625 = vmatprep.subr.mxu0 0.0
      %626 = vmatpush1.msra.mxu0 0.0
      %627 = vmatprep.subr.mxu0 0.0
      %628 = vmatpush1.msra.mxu0 0.0
      %629 = vmatprep.subr.mxu0 0.0
      %630 = vmatpush1.msra.mxu0 0.0
      %631 = vmatprep.subr.mxu0 0.0
      %632 = vmatpush1.msra.mxu0 0.0
      %633 = vmatprep.subr.mxu0 0.0
      %634 = vmatpush1.msra.mxu0 0.0
      %635 = vmatprep.mubr.f32.mxu0 0.0
      %636 = vmatmul.mubr.f32.gmra.mrb[0].mxu0 %v565
      %v637 = vpop.f32.mrb[0].mxu0
      %v638 = vadd.f32 0.0, %v637
      %v639 = vpop.f32.mrb[0].mxu0
      %640 = vdwg.mxu0
      %v641 = vmul.f32 %v555, %v638
      %v642 = vpack.c.bf16 %v641, %v641
      %v643 = vld [vmem:[%s3 + $0x80] sm:$0xf]
      %v644 = vld [vmem:[%s3 + $0x88] sm:$0xf]
      %v645 = vld [vmem:[%s3 + $0x90] sm:$0xf]
      %v646 = vld [vmem:[%s3 + $0x98] sm:$0xf]
      %v651 = vunpack.c.l.b16 %v643
      %v652 = vunpack.c.l.b16 %v644
      %v653 = vunpack.c.l.b16 %v645
      %v654 = vunpack.c.l.b16 %v646
      %v655 = vpack.c.b16 %v652, %v651
      %v656 = vpack.c.b16 %v654, %v653
      %v660 = vsel %vm458, %v642, 0
      %662 = vmatprep.subr.bf16.mxu0 0
      %663 = vmatpush1.bf16.msra.mxu0 %v655
      %664 = vmatprep.subr.bf16.mxu0 0
      %665 = vmatpush1.bf16.msra.mxu0 %v656
      %666 = vmatprep.subr.bf16.mxu0 0
      %667 = vmatpush1.bf16.msra.mxu0 0
      %668 = vmatprep.subr.bf16.mxu0 0
      %669 = vmatpush1.bf16.msra.mxu0 0
      %670 = vmatprep.subr.bf16.mxu0 0
      %671 = vmatpush1.bf16.msra.mxu0 0
      %672 = vmatprep.subr.bf16.mxu0 0
      %673 = vmatpush1.bf16.msra.mxu0 0
      %674 = vmatprep.subr.bf16.mxu0 0
      %675 = vmatpush1.bf16.msra.mxu0 0
      %676 = vmatprep.subr.bf16.mxu0 0
      %677 = vmatpush1.bf16.msra.mxu0 0
      %678 = vmatprep.subr.bf16.mxu0 0
      %679 = vmatpush1.bf16.msra.mxu0 0
      %680 = vmatprep.subr.bf16.mxu0 0
      %681 = vmatpush1.bf16.msra.mxu0 0
      %682 = vmatprep.subr.bf16.mxu0 0
      %683 = vmatpush1.bf16.msra.mxu0 0
      %684 = vmatprep.subr.bf16.mxu0 0
      %685 = vmatpush1.bf16.msra.mxu0 0
      %686 = vmatprep.subr.bf16.mxu0 0
      %687 = vmatpush1.bf16.msra.mxu0 0
      %688 = vmatprep.subr.bf16.mxu0 0
      %689 = vmatpush1.bf16.msra.mxu0 0
      %690 = vmatprep.subr.bf16.mxu0 0
      %691 = vmatpush1.bf16.msra.mxu0 0
      %692 = vmatprep.subr.bf16.mxu0 0
      %693 = vmatpush1.bf16.msra.mxu0 0
      %694 = vmatprep.mubr.bf16.mxu0 0
      %695 = vmatmul.mubr.bf16.gmra.mrb[0].mxu0 %v660
      %v696 = vpop.f32.mrb[0].mxu0
      %v697 = vadd.f32 %v240, %v696
      %v698 = vpop.f32.mrb[0].mxu0
      %v699 = vpop.f32.mrb[0].mxu0
      %v700 = vpop.f32.mrb[0].mxu0
      %701 = vdwg.mxu0
      %v702 = vadd.f32 %v238, %v697
      %v703 = vmul.f32 %v702, %v702
      %704 = vadd.xlane.f32.xlu0 %v703
      %v705 = vpop.xlane.xlu0 %704
      %v706 = vmul.f32 %v705, 0.03125
      %v707 = vadd.f32 %v706, 1e-06
      %v708 = vrsqrt.pop %v707
      %v709 = vmul.f32 %v702, %v708
      %v710 = vmul.f32 %v242, %v709
      %v711 = vpack.c.bf16 %v710, %v710
      %v712 = vld [vmem:[%s3 + $0xa0] sm:$0xf]
      %v713 = vld [vmem:[%s3 + $0xa8] sm:$0xf]
      %v714 = vld [vmem:[%s3 + $0xb0] sm:$0xf]
      %v715 = vld [vmem:[%s3 + $0xb8] sm:$0xf]
      %v716 = vld [vmem:[%s3 + $0xc0] sm:$0xf]
      %v717 = vld [vmem:[%s3 + $0xc8] sm:$0xf]
      %v718 = vld [vmem:[%s3 + $0xd0] sm:$0xf]
      %v719 = vld [vmem:[%s3 + $0xd8] sm:$0xf]
      %v720 = vld [vmem:[%s3 + $0xe0] sm:$0xf]
      %v721 = vld [vmem:[%s3 + $0xe8] sm:$0xf]
      %v722 = vld [vmem:[%s3 + $0xf0] sm:$0xf]
      %v723 = vld [vmem:[%s3 + $0xf8] sm:$0xf]
      %v724 = vld [vmem:[%s3 + $0x100] sm:$0xf]
      %v725 = vld [vmem:[%s3 + $0x108] sm:$0xf]
      %v726 = vld [vmem:[%s3 + $0x110] sm:$0xf]
      %v727 = vld [vmem:[%s3 + $0x118] sm:$0xf]
      %v744 = vunpack.c.l.b16 %v712
      %v745 = vunpack.c.l.b16 %v713
      %v746 = vunpack.c.l.b16 %v714
      %v747 = vunpack.c.l.b16 %v715
      %v748 = vunpack.c.l.b16 %v716
      %v749 = vunpack.c.l.b16 %v717
      %v750 = vunpack.c.l.b16 %v718
      %v751 = vunpack.c.l.b16 %v719
      %v752 = vunpack.c.l.b16 %v720
      %v753 = vunpack.c.l.b16 %v721
      %v754 = vunpack.c.l.b16 %v722
      %v755 = vunpack.c.l.b16 %v723
      %v756 = vunpack.c.l.b16 %v724
      %v757 = vunpack.c.l.b16 %v725
      %v758 = vunpack.c.l.b16 %v726
      %v759 = vunpack.c.l.b16 %v727
      %v760 = vpack.c.b16 %v745, %v744
      %v761 = vpack.c.b16 %v747, %v746
      %v762 = vpack.c.b16 %v749, %v748
      %v763 = vpack.c.b16 %v751, %v750
      %v764 = vpack.c.b16 %v753, %v752
      %v765 = vpack.c.b16 %v755, %v754
      %v766 = vpack.c.b16 %v757, %v756
      %v767 = vpack.c.b16 %v759, %v758
      %776 = vmatprep.subr.bf16.mxu0 0
      %777 = vmatpush1.bf16.msra.mxu0 %v760
      %778 = vmatprep.subr.bf16.mxu0 0
      %779 = vmatpush1.bf16.msra.mxu0 %v761
      %780 = vmatprep.subr.bf16.mxu0 0
      %781 = vmatpush1.bf16.msra.mxu0 %v762
      %782 = vmatprep.subr.bf16.mxu0 0
      %783 = vmatpush1.bf16.msra.mxu0 %v763
      %784 = vmatprep.subr.bf16.mxu0 0
      %785 = vmatpush1.bf16.msra.mxu0 %v764
      %786 = vmatprep.subr.bf16.mxu0 0
      %787 = vmatpush1.bf16.msra.mxu0 %v765
      %788 = vmatprep.subr.bf16.mxu0 0
      %789 = vmatpush1.bf16.msra.mxu0 %v766
      %790 = vmatprep.subr.bf16.mxu0 0
      %791 = vmatpush1.bf16.msra.mxu0 %v767
      %792 = vmatprep.subr.bf16.mxu0 0
      %793 = vmatpush1.bf16.msra.mxu0 0
      %794 = vmatprep.subr.bf16.mxu0 0
      %795 = vmatpush1.bf16.msra.mxu0 0
      %796 = vmatprep.subr.bf16.mxu0 0
      %797 = vmatpush1.bf16.msra.mxu0 0
      %798 = vmatprep.subr.bf16.mxu0 0
      %799 = vmatpush1.bf16.msra.mxu0 0
      %800 = vmatprep.subr.bf16.mxu0 0
      %801 = vmatpush1.bf16.msra.mxu0 0
      %802 = vmatprep.subr.bf16.mxu0 0
      %803 = vmatpush1.bf16.msra.mxu0 0
      %804 = vmatprep.subr.bf16.mxu0 0
      %805 = vmatpush1.bf16.msra.mxu0 0
      %806 = vmatprep.subr.bf16.mxu0 0
      %807 = vmatpush1.bf16.msra.mxu0 0
      %808 = vmatprep.mubr.bf16.mxu0 0
      %809 = vmatmul.mubr.bf16.gmra.mrb[0].mxu0 %v711
      %v810 = vpop.f32.mrb[0].mxu0
      %v811 = vadd.f32 0.0, %v810
      %v812 = vpop.f32.mrb[0].mxu0
      %v813 = vpop.f32.mrb[0].mxu0
      %v814 = vpop.f32.mrb[0].mxu0
      %815 = vdwg.mxu0
      %v816 = vxor.u32 %v811, 2147483648
      %v817 = vmul.f32 %v816, 1.442695
      %v818 = vpow.pop %v817
      %v819 = vadd.f32 %v818, 1.0
      %v820 = vrcp.pop %v819
      %v821 = vmul.f32 1.0, %v820
      %v822 = vmul.f32 %v811, %v821
      %824 = vrot.lane.b32.xlu0 %v811, 64
      %v825 = vpop.permute.xlu0 %824
      %v827 = vmul.f32 %v822, %v825
      %v828 = vpack.c.bf16 %v827, %v827
      %v829 = vld [vmem:[%s3 + $0x120] sm:$0xf]
      %v830 = vld [vmem:[%s3 + $0x128] sm:$0xf]
      %v831 = vld [vmem:[%s3 + $0x130] sm:$0xf]
      %v832 = vld [vmem:[%s3 + $0x138] sm:$0xf]
      %v833 = vld [vmem:[%s3 + $0x140] sm:$0xf]
      %v834 = vld [vmem:[%s3 + $0x148] sm:$0xf]
      %v835 = vld [vmem:[%s3 + $0x150] sm:$0xf]
      %v836 = vld [vmem:[%s3 + $0x158] sm:$0xf]
      %v845 = vunpack.c.l.b16 %v829
      %v846 = vunpack.c.l.b16 %v830
      %v847 = vunpack.c.l.b16 %v831
      %v848 = vunpack.c.l.b16 %v832
      %v849 = vunpack.c.l.b16 %v833
      %v850 = vunpack.c.l.b16 %v834
      %v851 = vunpack.c.l.b16 %v835
      %v852 = vunpack.c.l.b16 %v836
      %v853 = vpack.c.b16 %v846, %v845
      %v854 = vpack.c.b16 %v848, %v847
      %v855 = vpack.c.b16 %v850, %v849
      %v856 = vpack.c.b16 %v852, %v851
      %vm861 = vcmask 523264
      %v863 = vsel %vm861, %v828, 0
      %865 = vmatprep.subr.bf16.mxu0 0
      %866 = vmatpush1.bf16.msra.mxu0 %v853
      %867 = vmatprep.subr.bf16.mxu0 0
      %868 = vmatpush1.bf16.msra.mxu0 %v854
      %869 = vmatprep.subr.bf16.mxu0 0
      %870 = vmatpush1.bf16.msra.mxu0 %v855
      %871 = vmatprep.subr.bf16.mxu0 0
      %872 = vmatpush1.bf16.msra.mxu0 %v856
      %873 = vmatprep.subr.bf16.mxu0 0
      %874 = vmatpush1.bf16.msra.mxu0 0
      %875 = vmatprep.subr.bf16.mxu0 0
      %876 = vmatpush1.bf16.msra.mxu0 0
      %877 = vmatprep.subr.bf16.mxu0 0
      %878 = vmatpush1.bf16.msra.mxu0 0
      %879 = vmatprep.subr.bf16.mxu0 0
      %880 = vmatpush1.bf16.msra.mxu0 0
      %881 = vmatprep.subr.bf16.mxu0 0
      %882 = vmatpush1.bf16.msra.mxu0 0
      %883 = vmatprep.subr.bf16.mxu0 0
      %884 = vmatpush1.bf16.msra.mxu0 0
      %885 = vmatprep.subr.bf16.mxu0 0
      %886 = vmatpush1.bf16.msra.mxu0 0
      %887 = vmatprep.subr.bf16.mxu0 0
      %888 = vmatpush1.bf16.msra.mxu0 0
      %889 = vmatprep.subr.bf16.mxu0 0
      %890 = vmatpush1.bf16.msra.mxu0 0
      %891 = vmatprep.subr.bf16.mxu0 0
      %892 = vmatpush1.bf16.msra.mxu0 0
      %893 = vmatprep.subr.bf16.mxu0 0
      %894 = vmatpush1.bf16.msra.mxu0 0
      %895 = vmatprep.subr.bf16.mxu0 0
      %896 = vmatpush1.bf16.msra.mxu0 0
      %897 = vmatprep.mubr.bf16.mxu0 0
      %898 = vmatmul.mubr.bf16.gmra.mrb[0].mxu0 %v863
      %v899 = vpop.f32.mrb[0].mxu0
      %v900 = vadd.f32 0.0, %v899
      %v901 = vpop.f32.mrb[0].mxu0
      %v902 = vpop.f32.mrb[0].mxu0
      %v903 = vpop.f32.mrb[0].mxu0
      %904 = vdwg.mxu0
      %v905 = vadd.f32 %v702, %v900
      %906 = vst [vmem:[%s236] sm:$0xff] %v905
      %p907 = scmp.lt.s32.totalorder %s16, 1
      %s908 = scalar_select %p907, %s16, 1
      %s909 = smul.addr %s908, 8
      %s910 = scalar_lea.vmem %s5, %s909
      // Predicated region
      $region41: #{internlm_decoder_layer.1} parent=39 // pred_check
        %p911 = pneg %p149
      $region42: #{internlm_decoder_layer.1} parent=39 // pred_check_branch
        %913 = sbr.rel (%p911) target = $region44
      $region43: #{internlm_decoder_layer.1} parent=39 // pred_region
        _
      $region44: #{internlm_decoder_layer.1} parent=39 // pred_fallthru
        _
    $region40: #{internlm_decoder_layer.1} parent=5 // pred_fallthru
      _
    %p914 = scmp.le.s32.totalorder 2, %s11
    // Predicated region
    $region45: #{internlm_decoder_layer.1} parent=5 // pred_check
      %p915 = pneg %p914
    $region46: #{internlm_decoder_layer.1} parent=5 // pred_check_branch
      %917 = sbr.rel (%p915) target = $region48
    $region47: #{internlm_decoder_layer.1} parent=5 // pred_region
      %s918 = ssub.s32 %s11, 2
      // Predicated region
      $region49: #{internlm_decoder_layer.1} parent=47 // pred_check
        %p919 = pneg %p155
      $region50: #{internlm_decoder_layer.1} parent=47 // pred_check_branch
        %921 = sbr.rel (%p919) target = $region52
      $region51: #{internlm_decoder_layer.1} parent=47 // pred_region
        %p922 = scmp.lt.s32.totalorder %s17, 1
        %s923 = scalar_select %p922, %s17, 1
        %s924 = smul.addr %s923, 8
        %s925 = scalar_lea.vmem %s5, %s924
      $region52: #{internlm_decoder_layer.1} parent=47 // pred_fallthru
        _
    $region48: #{internlm_decoder_layer.1} parent=5 // pred_fallthru
      _
  $region6: #{internlm_decoder_layer.1} parent=0 // loop_footer
    %s15 = sadd.s32 1, %s11
  $region7: #{internlm_decoder_layer.1} parent=0 // loop_footer_branch
    %10 = sbr.rel target = $region3
  $region8: #{internlm_decoder_layer.1} parent=0 // loop_exit
    _

</llo_original>
